<compile_context>
chip_gen: v5e
topology: v5e:2x2
jax: 0.10.0
libtpu: 0.0.40
codegen_flags: <defaults>
</compile_context>

<pallas_src>
import functools

import jax
import jax.numpy as jnp
from jax import lax
from jax.experimental import pallas as pl
from jax.experimental.pallas import tpu as pltpu

NEG_SLOPE = 0.01   # nn.LeakyReLU default
PAD_IO = 8         # sublane-aligned io dimension used for the MXU operands
CHUNK = 512        # lanes processed per inner-loop step (keeps live vregs small)


def _round_up(n, m):
    return -(-n // m) * m


def _choose_tiling(batch, block_b):
    """Pick (batch tile, chunk) -- both multiples of 128, tile a multiple of chunk."""
    b128 = _round_up(max(batch, 1), 128)
    tb = min(_round_up(block_b, 128), b128)
    # Keep >= 2 grid steps so both v7x TensorCores get work (harmless on v5e/v6e:
    # one extra ~0.35us grid step).
    if b128 // tb < 2 and b128 >= 256:
        tb = _round_up(b128 // 2, 128)
    if tb >= CHUNK:
        tb = _round_up(tb, CHUNK)
        ch = CHUNK
    else:
        ch = tb
    return tb, ch


def knowledge_model_kernel(
    x_ref,      # VMEM (io_dim, TB)              lane-dense input tile (batch on lanes)
    w1p_ref,    # VMEM (hidden, PAD_IO + 1)      [W1^T | 0 | b1]
    wt_ref,     # VMEM (PAD_IO, hidden + PAD_IO) [(W2@W3a)^T | (A@W3b)^T]  (rows 3:8 zero)
    bias_ref,   # VMEM (io_dim, 1)               (b2@W3a + b3 + t*(c@W3b))^T
    out_ref,    # VMEM (io_dim, TB)
    *, io_dim, hidden, ch, n_chunks,
):
    w1p = w1p_ref[...]
    w1t_pad = w1p[:, :PAD_IO]                    # (hidden, 8)
    b1 = w1p[:, PAD_IO:PAD_IO + 1]               # (hidden, 1)
    wt = wt_ref[...]
    w23at_pad = wt[:, :hidden]                   # (8, hidden)
    wa3bt_pad = wt[:, hidden:hidden + PAD_IO]    # (8, 8)
    bias = bias_ref[...]                         # (io_dim, 1)
    zpad = jnp.zeros((PAD_IO - io_dim, ch), jnp.float32)   # hoisted, chunk-invariant

    def compute(xc):
        # xc: (io_dim, ch). Zero-pad sublanes to 8 so every MXU dim is aligned.
        xp = jnp.concatenate([xc, zpad], axis=0)                         # (8, ch)
        # layer1 + LeakyReLU on the MXU (K padded with zero columns -> exact).
        h = jnp.dot(w1t_pad, xp, preferred_element_type=jnp.float32) + b1
        h = jnp.where(h > 0, h, NEG_SLOPE * h)                           # (hidden, ch)
        # fused linear tail: (W2@W3a)^T h + (A@W3b)^T x + bias  (MXU, padded rows = 0)
        acc = jnp.dot(w23at_pad, h, preferred_element_type=jnp.float32)
        acc = acc + jnp.dot(wa3bt_pad, xp, preferred_element_type=jnp.float32)
        return (acc[:io_dim, :] + bias).astype(out_ref.dtype)

    if n_chunks == 1:
        out_ref[...] = compute(x_ref[...])
    else:
        def body(c, carry):
            start = pl.multiple_of(c * ch, ch)   # ch is a multiple of 128 -> aligned
            out_ref[:, pl.ds(start, ch)] = compute(x_ref[:, pl.ds(start, ch)])
            return carry
        lax.fori_loop(0, n_chunks, body, 0, unroll=n_chunks <= 4)


def _pallas_forward(x_t, w1_pack, w_tail, bias, *, tb, ch):
    io_dim, b_pad = x_t.shape
    hidden = w1_pack.shape[0]
    kernel = functools.partial(
        knowledge_model_kernel, io_dim=io_dim, hidden=hidden, ch=ch, n_chunks=tb // ch)
    grid_spec = pltpu.PrefetchScalarGridSpec(
        num_scalar_prefetch=0,
        grid=(b_pad // tb,),
        in_specs=[
            pl.BlockSpec((io_dim, tb), lambda i: (0, i)),       # x: streamed per tile
            pl.BlockSpec(w1_pack.shape, lambda i: (0, 0)),      # weights stay resident
            pl.BlockSpec(w_tail.shape, lambda i: (0, 0)),
            pl.BlockSpec(bias.shape, lambda i: (0, 0)),
        ],
        out_specs=pl.BlockSpec((io_dim, tb), lambda i: (0, i)),
    )
    return pl.pallas_call(
        kernel,
        out_shape=jax.ShapeDtypeStruct((io_dim, b_pad), jnp.float32),
        grid_spec=grid_spec,
        compiler_params=pltpu.CompilerParams(
            dimension_semantics=("parallel",)),   # megacore sharding on v7x
    )(x_t, w1_pack, w_tail, bias)


@functools.partial(jax.jit, static_argnames=("block_b",))
def knowledge_model_forward_lane_dense(t, x_t, kp, *, block_b=16384):
    """Lane-dense entry point: x_t is (io_dim, B), returns (io_dim, B).

    Keeping the ODE state in this layout across integrator steps avoids the
    wrapper transpose / pad HBM round trips entirely (use B % 128 == 0).
    """
    io_dim, batch = x_t.shape
    tb, ch = _choose_tiling(batch, block_b)
    b_pad = _round_up(batch, tb)
    xp = x_t.astype(jnp.float32)
    if b_pad != batch:
        xp = jnp.pad(xp, ((0, 0), (0, b_pad - batch)))
    # fold the per-call scalar t into a single fused bias (3 elements; free)
    bias = kp["bft"] + jnp.asarray(t, jnp.float32) * kp["c3bt"]
    out = _pallas_forward(xp, kp["w1_pack"], kp["w_tail"], bias, tb=tb, ch=ch)
    return out if b_pad == batch else out[:, :batch]


@functools.partial(jax.jit, static_argnames=("block_b",))
def knowledge_model_forward(t, x, kp, *, block_b=16384):
    """PyTorch layout: x is (B, io_dim); returns (B, io_dim)."""
    return knowledge_model_forward_lane_dense(t, x.T, kp, block_b=block_b).T


def init_params(key, io_dim, hidden_dim):
    """Raw parameters (PyTorch-style uniform fan-in init).

    PyTorch Linear stores weight as (out, in); we store the transpose (in, out)
    so the math reads x @ W + b.  `A` is stored in the orientation it is applied
    in (known_model(t, x) = x @ A + t * c).
    """
    ks = jax.random.split(key, 8)

    def lin(kw, kb, fan_in, fan_out):
        bound = 1.0 / jnp.sqrt(fan_in)
        w = jax.random.uniform(kw, (fan_in, fan_out), jnp.float32, -bound, bound)
        b = jax.random.uniform(kb, (1, fan_out), jnp.float32, -bound, bound)
        return w, b

    w1, b1 = lin(ks[0], ks[1], io_dim, hidden_dim)
    w2, b2 = lin(ks[2], ks[3], hidden_dim, io_dim)
    w3, b3 = lin(ks[4], ks[5], 2 * io_dim, io_dim)
    w3a = w3[:io_dim, :]     # layer3 block acting on x_net
    w3b = w3[io_dim:, :]     # layer3 block acting on x_known
    A = jax.random.uniform(ks[6], (io_dim, io_dim), jnp.float32, -1.0, 1.0)
    c = jax.random.uniform(ks[7], (1, io_dim), jnp.float32, -1.0, 1.0)
    return {"w1": w1, "b1": b1, "w2": w2, "b2": b2,
            "w3a": w3a, "w3b": w3b, "b3": b3, "A": A, "c": c}


def prepare_kernel_params(p):
    """Fold the linear tail, pad io->8 for MXU alignment, pack operands.

    Done ONCE per parameter set (not per call):
      W23a = W2 @ W3a, WA3b = A @ W3b, c3b = c @ W3b, b_f = b2 @ W3a + b3
    Note: offline folding changes f32 associativity vs the un-fused module
    (matches to ~1e-5 relative, not bitwise).
    """
    io = p["w1"].shape[0]
    hidden = p["w1"].shape[1]

    w1t_pad = jnp.pad(p["w1"].T, ((0, 0), (0, PAD_IO - io)))          # (hidden, 8)
    w1_pack = jnp.concatenate([w1t_pad, p["b1"].T], axis=1)           # (hidden, 9)

    w23at = (p["w2"] @ p["w3a"]).T                                    # (io, hidden)
    wa3bt = (p["A"] @ p["w3b"]).T                                     # (io, io)
    w23at_pad = jnp.pad(w23at, ((0, PAD_IO - io), (0, 0)))            # (8, hidden)
    wa3bt_pad = jnp.pad(wa3bt, ((0, PAD_IO - io), (0, PAD_IO - io)))  # (8, 8)
    w_tail = jnp.concatenate([w23at_pad, wa3bt_pad], axis=1)          # (8, hidden+8)

    c3bt = (p["c"] @ p["w3b"]).T                                      # (io, 1)
    bft = (p["b2"] @ p["w3a"] + p["b3"]).T                            # (io, 1)
    return {"w1_pack": w1_pack, "w_tail": w_tail, "c3bt": c3bt, "bft": bft}


def reference_forward(t, x, p):
    """Pure-JAX reference of the original (un-fused) module math."""
    h = x @ p["w1"] + p["b1"]
    h = jnp.where(h > 0, h, NEG_SLOPE * h)
    x_net = h @ p["w2"] + p["b2"]
    x_known = x @ p["A"] + t * p["c"]
    x_combined = jnp.concatenate([x_net, x_known], axis=1)
    w3 = jnp.concatenate([p["w3a"], p["w3b"]], axis=0)
    return x_combined @ w3 + p["b3"]


if __name__ == "__main__":
    io_dim = 3
    hidden_dim = 32
    batch = 2048   # -> 2 grid steps of 1024 lanes, each looping over 2x512-lane chunks

    key = jax.random.PRNGKey(0)
    k_param, k_x, k_x2 = jax.random.split(key, 3)
    params = init_params(k_param, io_dim, hidden_dim)
    kparams = prepare_kernel_params(params)

    t = jnp.float32(0.5)
    x = jax.random.normal(k_x, (batch, io_dim), jnp.float32)

    out = jax.block_until_ready(knowledge_model_forward(t, x, kparams))
    ref = reference_forward(t, x, params)
    assert out.shape == (batch, io_dim)
    assert jnp.allclose(out, ref, atol=1e-4, rtol=1e-4), "mismatch vs reference"

    # Also exercise the pad/trim path with a non-128-multiple batch.
    x2 = jax.random.normal(k_x2, (200, io_dim), jnp.float32)
    out2 = jax.block_until_ready(knowledge_model_forward(t, x2, kparams))
    ref2 = reference_forward(t, x2, params)
    assert out2.shape == (200, io_dim)
    assert jnp.allclose(out2, ref2, atol=1e-4, rtol=1e-4), "mismatch vs reference (padded)"

    print("KERNEL_OK")
</pallas_src>

<mosaic_0001>
module attributes {stable_mosaic.version = 11 : i64} {
  func.func @knowledge_model_kernel(%arg0: i32, %arg1: memref<3x1024xf32, #tpu.memory_space<vmem>>, %arg2: memref<32x9xf32, #tpu.memory_space<vmem>>, %arg3: memref<8x40xf32, #tpu.memory_space<vmem>>, %arg4: memref<3x1xf32, #tpu.memory_space<vmem>>, %arg5: memref<3x1024xf32, #tpu.memory_space<vmem>>) attributes {dimension_semantics = [#tpu.dimension_semantics<parallel>], iteration_bounds = array<i64: 2>, scalar_prefetch = 0 : i64, scratch_operands = 0 : i64, tpu.core_type = #tpu.core_type<tc>, window_params = [{transform_indices = @transform_0, window_bounds = array<i64: 3, 1024>}, {pipeline_mode = #tpu.pipeline_mode<synchronous>, transform_indices = @transform_1, window_bounds = array<i64: 32, 9>}, {pipeline_mode = #tpu.pipeline_mode<synchronous>, transform_indices = @transform_2, window_bounds = array<i64: 8, 40>}, {pipeline_mode = #tpu.pipeline_mode<synchronous>, transform_indices = @transform_3, window_bounds = array<i64: 3, 1>}, {transform_indices = @transform_4, window_bounds = array<i64: 3, 1024>}]} {
    %c0 = arith.constant 0 : index
    %c0_0 = arith.constant 0 : index
    %0 = vector.load %arg2[%c0, %c0_0] : memref<32x9xf32, #tpu.memory_space<vmem>>, vector<32x9xf32>
    %1 = vector.extract_strided_slice %0 {offsets = [0, 0], sizes = [32, 8], strides = [1, 1]} : vector<32x9xf32> to vector<32x8xf32>
    %2 = vector.extract_strided_slice %0 {offsets = [0, 8], sizes = [32, 1], strides = [1, 1]} : vector<32x9xf32> to vector<32x1xf32>
    %c0_1 = arith.constant 0 : index
    %c0_2 = arith.constant 0 : index
    %3 = vector.load %arg3[%c0_1, %c0_2] : memref<8x40xf32, #tpu.memory_space<vmem>>, vector<8x40xf32>
    %4 = vector.extract_strided_slice %3 {offsets = [0, 0], sizes = [8, 32], strides = [1, 1]} : vector<8x40xf32> to vector<8x32xf32>
    %5 = vector.extract_strided_slice %3 {offsets = [0, 32], sizes = [8, 8], strides = [1, 1]} : vector<8x40xf32> to vector<8x8xf32>
    %c0_3 = arith.constant 0 : index
    %c0_4 = arith.constant 0 : index
    %6 = vector.load %arg4[%c0_3, %c0_4] : memref<3x1xf32, #tpu.memory_space<vmem>>, vector<3x1xf32>
    %cst = arith.constant 0.000000e+00 : f32
    %7 = vector.broadcast %cst : f32 to vector<5x512xf32>
    %c0_i32 = arith.constant 0 : i32
    %c512_i32 = arith.constant 512 : i32
    %8 = arith.muli %c0_i32, %c512_i32 : i32
    %9 = tpu.assume_multiple %8, 512 : i32
    %c0_5 = arith.constant 0 : index
    %10 = arith.index_cast %9 : i32 to index
    %11 = vector.load %arg1[%c0_5, %10] : memref<3x1024xf32, #tpu.memory_space<vmem>>, vector<3x512xf32>
    %12 = tpu.concatenate %11, %7 in 0 : vector<3x512xf32>, vector<5x512xf32> -> vector<8x512xf32>
    %cst_6 = arith.constant dense<0.000000e+00> : vector<32x512xf32>
    %13 = tpu.matmul %1, %12, %cst_6 {dimension_numbers = #tpu.dot_dimension_numbers<[1], [0], [0], [1], [0, 0, 1, 1], [], []>} : vector<32x8xf32>, vector<8x512xf32>, vector<32x512xf32> -> vector<32x512xf32>
    %14 = vector.broadcast %2 : vector<32x1xf32> to vector<32x512xf32>
    %15 = arith.addf %13, %14 : vector<32x512xf32>
    %cst_7 = arith.constant 0.000000e+00 : f32
    %16 = vector.broadcast %cst_7 : f32 to vector<32x512xf32>
    %17 = arith.cmpf ogt, %15, %16 : vector<32x512xf32>
    %cst_8 = arith.constant 0.00999999977 : f32
    %18 = vector.broadcast %cst_8 : f32 to vector<32x512xf32>
    %19 = arith.mulf %18, %15 : vector<32x512xf32>
    %20 = arith.select %17, %15, %19 : vector<32x512xi1>, vector<32x512xf32>
    %cst_9 = arith.constant dense<0.000000e+00> : vector<8x512xf32>
    %21 = tpu.matmul %4, %20, %cst_9 {dimension_numbers = #tpu.dot_dimension_numbers<[1], [0], [0], [1], [0, 0, 1, 1], [], []>} : vector<8x32xf32>, vector<32x512xf32>, vector<8x512xf32> -> vector<8x512xf32>
    %cst_10 = arith.constant dense<0.000000e+00> : vector<8x512xf32>
    %22 = tpu.matmul %5, %12, %cst_10 {dimension_numbers = #tpu.dot_dimension_numbers<[1], [0], [0], [1], [0, 0, 1, 1], [], []>} : vector<8x8xf32>, vector<8x512xf32>, vector<8x512xf32> -> vector<8x512xf32>
    %23 = arith.addf %21, %22 : vector<8x512xf32>
    %24 = vector.extract_strided_slice %23 {offsets = [0, 0], sizes = [3, 512], strides = [1, 1]} : vector<8x512xf32> to vector<3x512xf32>
    %25 = vector.broadcast %6 : vector<3x1xf32> to vector<3x512xf32>
    %26 = arith.addf %24, %25 : vector<3x512xf32>
    %c0_11 = arith.constant 0 : index
    %27 = arith.index_cast %9 : i32 to index
    %28 = vector.load %arg5[%c0_11, %27] : memref<3x1024xf32, #tpu.memory_space<vmem>>, vector<3x512xf32>
    tpu.vector_store %arg5[%c0_11, %27], %26 {strides = array<i32>} : memref<3x1024xf32, #tpu.memory_space<vmem>>, vector<3x512xf32>,
    %c1_i32 = arith.constant 1 : i32
    %c512_i32_12 = arith.constant 512 : i32
    %29 = arith.muli %c1_i32, %c512_i32_12 : i32
    %30 = tpu.assume_multiple %29, 512 : i32
    %c0_13 = arith.constant 0 : index
    %31 = arith.index_cast %30 : i32 to index
    %32 = vector.load %arg1[%c0_13, %31] : memref<3x1024xf32, #tpu.memory_space<vmem>>, vector<3x512xf32>
    %33 = tpu.concatenate %32, %7 in 0 : vector<3x512xf32>, vector<5x512xf32> -> vector<8x512xf32>
    %cst_14 = arith.constant dense<0.000000e+00> : vector<32x512xf32>
    %34 = tpu.matmul %1, %33, %cst_14 {dimension_numbers = #tpu.dot_dimension_numbers<[1], [0], [0], [1], [0, 0, 1, 1], [], []>} : vector<32x8xf32>, vector<8x512xf32>, vector<32x512xf32> -> vector<32x512xf32>
    %35 = vector.broadcast %2 : vector<32x1xf32> to vector<32x512xf32>
    %36 = arith.addf %34, %35 : vector<32x512xf32>
    %cst_15 = arith.constant 0.000000e+00 : f32
    %37 = vector.broadcast %cst_15 : f32 to vector<32x512xf32>
    %38 = arith.cmpf ogt, %36, %37 : vector<32x512xf32>
    %cst_16 = arith.constant 0.00999999977 : f32
    %39 = vector.broadcast %cst_16 : f32 to vector<32x512xf32>
    %40 = arith.mulf %39, %36 : vector<32x512xf32>
    %41 = arith.select %38, %36, %40 : vector<32x512xi1>, vector<32x512xf32>
    %cst_17 = arith.constant dense<0.000000e+00> : vector<8x512xf32>
    %42 = tpu.matmul %4, %41, %cst_17 {dimension_numbers = #tpu.dot_dimension_numbers<[1], [0], [0], [1], [0, 0, 1, 1], [], []>} : vector<8x32xf32>, vector<32x512xf32>, vector<8x512xf32> -> vector<8x512xf32>
    %cst_18 = arith.constant dense<0.000000e+00> : vector<8x512xf32>
    %43 = tpu.matmul %5, %33, %cst_18 {dimension_numbers = #tpu.dot_dimension_numbers<[1], [0], [0], [1], [0, 0, 1, 1], [], []>} : vector<8x8xf32>, vector<8x512xf32>, vector<8x512xf32> -> vector<8x512xf32>
    %44 = arith.addf %42, %43 : vector<8x512xf32>
    %45 = vector.extract_strided_slice %44 {offsets = [0, 0], sizes = [3, 512], strides = [1, 1]} : vector<8x512xf32> to vector<3x512xf32>
    %46 = vector.broadcast %6 : vector<3x1xf32> to vector<3x512xf32>
    %47 = arith.addf %45, %46 : vector<3x512xf32>
    %c0_19 = arith.constant 0 : index
    %48 = arith.index_cast %30 : i32 to index
    %49 = vector.load %arg5[%c0_19, %48] : memref<3x1024xf32, #tpu.memory_space<vmem>>, vector<3x512xf32>
    tpu.vector_store %arg5[%c0_19, %48], %47 {strides = array<i32>} : memref<3x1024xf32, #tpu.memory_space<vmem>>, vector<3x512xf32>,
    %c2_i32 = arith.constant 2 : i32
    return
  }
  func.func @transform_0(%arg0: i32) -> (i32, i32) {
    %c0_i32 = arith.constant 0 : i32
    %c0_i32_0 = arith.constant 0 : i32
    return %c0_i32, %arg0 : i32, i32
  }
  func.func @transform_1(%arg0: i32) -> (i32, i32) {
    %c0_i32 = arith.constant 0 : i32
    %c0_i32_0 = arith.constant 0 : i32
    %c0_i32_1 = arith.constant 0 : i32
    return %c0_i32, %c0_i32_0 : i32, i32
  }
  func.func @transform_2(%arg0: i32) -> (i32, i32) {
    %c0_i32 = arith.constant 0 : i32
    %c0_i32_0 = arith.constant 0 : i32
    %c0_i32_1 = arith.constant 0 : i32
    return %c0_i32, %c0_i32_0 : i32, i32
  }
  func.func @transform_3(%arg0: i32) -> (i32, i32) {
    %c0_i32 = arith.constant 0 : i32
    %c0_i32_0 = arith.constant 0 : i32
    %c0_i32_1 = arith.constant 0 : i32
    return %c0_i32, %c0_i32_0 : i32, i32
  }
  func.func @transform_4(%arg0: i32) -> (i32, i32) {
    %c0_i32 = arith.constant 0 : i32
    %c0_i32_0 = arith.constant 0 : i32
    return %c0_i32, %arg0 : i32, i32
  }
}

</mosaic_0001>

<llo_original>
// kernel: knowledge_model_forward_lane_dense.1
$region0: #{knowledge_model_forward_lane_dense.1}
  #allocation0 [shape = 'u32[]', space=smem, size = 0x4, offset = 0x4, fixed_abs, tag = 'smem constant byte address 0x4 - core index']
  #allocation1 [shape = 'u32[72,128]{1,0:T(1,128)}', space=vmem, size = 0x9000, scoped, tag = 'internal scratch']
  %s0 = inlined_call_operand.hbm [shape: f32[3,2048], index: 0, kind: input, shape index: {}]
  %s1 = inlined_call_operand.vmem [shape: f32[32,9], index: 1, kind: input, shape index: {}]
  %s2 = inlined_call_operand.vmem [shape: f32[8,40], index: 2, kind: input, shape index: {}]
  %s3 = inlined_call_operand.vmem [shape: f32[3,1], index: 3, kind: input, shape index: {}]
  %s4 = inlined_call_operand.hbm [shape: f32[3,2048], index: 4, kind: output, shape index: {}]
  %s5 = sld [smem:[#allocation0]]
  $region53: #{knowledge_model_forward_lane_dense.1} parent=0
    _
  %s7 = ssub.s32 1, %s5
  %s8 = scalar_select 0, %s7, %s5
  $region1: #{knowledge_model_forward_lane_dense.1} parent=0
    #allocation2 [shape = 'u8[32768]{0}', space=vmem, size = 0x8000, scoped, tag = 'input window, operand 0']
    #allocation3 [shape = 's32[2]{0}', space=sflag, size = 0x8, scoped, tag = 'scoped memory for knowledge_model_forward_lane_dense.1']
    #allocation4 [shape = 's32[2]{0}', space=sflag, size = 0x8, scoped, tag = 'scoped memory for knowledge_model_forward_lane_dense.1']
    #allocation5 [shape = 'u8[32768]{0}', space=vmem, size = 0x8000, scoped, tag = 'output window, operand 0']
    %9 = vsyncpa [#allocation3], 0
    %s10 = scalar_lea.sflag [#allocation3], 1
    %11 = vsyncpa %s10, 0
    %12 = vsyncpa [#allocation4], 0
    %s13 = scalar_lea.sflag [#allocation4], 1
    %14 = vsyncpa %s13, 0
    loop: start=0, step=1, limit=4
    $region2: #{knowledge_model_forward_lane_dense.1} parent=1 // loop_pre_header
      _
    $region3: #{knowledge_model_forward_lane_dense.1} parent=1 // loop_header
      %s16 = sphi 0, %s20
      %p17 = scmp.ge.s32.totalorder %s16, 4
      %s26 = sphi 0, %s28
      %s29 = sphi 0, %s26
      %s30 = sphi 0, %s29
      %s46 = sphi 0, %s30
      %s50 = sphi 0, %s50
      %s52 = sphi 0, %s50
      %s53 = sphi 0, %s52
      %s67 = sphi 0, %s53
      %s71 = sphi 0, %s71
      %s73 = sphi 0, %s71
      %s74 = sphi 0, %s73
      %s88 = sphi 0, %s74
      %s92 = sphi 0, %s92
      %s94 = sphi 0, %s92
      %s95 = sphi 0, %s94
      %s109 = sphi 0, %s95
      %s115 = sphi 0, %s117
      %s118 = sphi 0, %s115
      %s119 = sphi 0, %s118
      %s135 = sphi 0, %s119
    $region4: #{knowledge_model_forward_lane_dense.1} parent=1 // loop_header_branch
      %19 = sbr.rel (%p17) target = $region8
    $region5: #{knowledge_model_forward_lane_dense.1} parent=1 // loop_body
      %s21 = ssub.s32 %s16, 1
      %s22 = ssub.s32 %s16, 2
      %s23 = sadd.s32 %s16, 1
      %s24 = ssub.s32 %s16, %s23
      %p25 = scmp.eq.s32.totalorder %s24, 0
      %s27 = sadd.s32 %s26, 1
      %s28 = scalar_select %p25, %s26, %s27
      %p31 = pneg %p25
      %p32 = scmp.eq.s32.totalorder %s16, 1
      %p33 = por %p31, %p32
      %p34 = scmp.ne.s32.totalorder %s26, %s29
      %p35 = scmp.eq.s32.totalorder %s16, 0
      %p36 = por %p34, %p35
      %p37 = scmp.ne.s32.totalorder %s26, %s29
      %p38 = scmp.eq.s32.totalorder %s21, 1
      %p39 = por %p37, %p38
      %p40 = scmp.ne.s32.totalorder %s29, %s30
      %p41 = scmp.eq.s32.totalorder %s21, 0
      %p42 = por %p40, %p41
      %p43 = scmp.ne.s32.totalorder %s29, %s30
      %p44 = scmp.eq.s32.totalorder %s22, 1
      %p45 = por %p43, %p44
      %p47 = scmp.ne.s32.totalorder %s30, %s46
      %p48 = scmp.eq.s32.totalorder %s22, 0
      %p49 = por %p47, %p48
      %s51 = sadd.s32 %s50, 1
      %p54 = scmp.eq.s32.totalorder %s16, 1
      %p55 = scmp.ne.s32.totalorder %s50, %s52
      %p56 = scmp.eq.s32.totalorder %s16, 0
      %p57 = por %p55, %p56
      %p58 = scmp.ne.s32.totalorder %s50, %s52
      %p59 = scmp.eq.s32.totalorder %s21, 1
      %p60 = por %p58, %p59
      %p61 = scmp.ne.s32.totalorder %s52, %s53
      %p62 = scmp.eq.s32.totalorder %s21, 0
      %p63 = por %p61, %p62
      %p64 = scmp.ne.s32.totalorder %s52, %s53
      %p65 = scmp.eq.s32.totalorder %s22, 1
      %p66 = por %p64, %p65
      %p68 = scmp.ne.s32.totalorder %s53, %s67
      %p69 = scmp.eq.s32.totalorder %s22, 0
      %p70 = por %p68, %p69
      %s72 = sadd.s32 %s71, 1
      %p75 = scmp.eq.s32.totalorder %s16, 1
      %p76 = scmp.ne.s32.totalorder %s71, %s73
      %p77 = scmp.eq.s32.totalorder %s16, 0
      %p78 = por %p76, %p77
      %p79 = scmp.ne.s32.totalorder %s71, %s73
      %p80 = scmp.eq.s32.totalorder %s21, 1
      %p81 = por %p79, %p80
      %p82 = scmp.ne.s32.totalorder %s73, %s74
      %p83 = scmp.eq.s32.totalorder %s21, 0
      %p84 = por %p82, %p83
      %p85 = scmp.ne.s32.totalorder %s73, %s74
      %p86 = scmp.eq.s32.totalorder %s22, 1
      %p87 = por %p85, %p86
      %p89 = scmp.ne.s32.totalorder %s74, %s88
      %p90 = scmp.eq.s32.totalorder %s22, 0
      %p91 = por %p89, %p90
      %s93 = sadd.s32 %s92, 1
      %p96 = scmp.eq.s32.totalorder %s16, 1
      %p97 = scmp.ne.s32.totalorder %s92, %s94
      %p98 = scmp.eq.s32.totalorder %s16, 0
      %p99 = por %p97, %p98
      %p100 = scmp.ne.s32.totalorder %s92, %s94
      %p101 = scmp.eq.s32.totalorder %s21, 1
      %p102 = por %p100, %p101
      %p103 = scmp.ne.s32.totalorder %s94, %s95
      %p104 = scmp.eq.s32.totalorder %s21, 0
      %p105 = por %p103, %p104
      %p106 = scmp.ne.s32.totalorder %s94, %s95
      %p107 = scmp.eq.s32.totalorder %s22, 1
      %p108 = por %p106, %p107
      %p110 = scmp.ne.s32.totalorder %s95, %s109
      %p111 = scmp.eq.s32.totalorder %s22, 0
      %p112 = por %p110, %p111
      %s113 = ssub.s32 %s16, %s23
      %p114 = scmp.eq.s32.totalorder %s113, 0
      %s116 = sadd.s32 %s115, 1
      %s117 = scalar_select %p114, %s115, %s116
      %p120 = pneg %p114
      %p121 = scmp.eq.s32.totalorder %s16, 1
      %p122 = por %p120, %p121
      %p123 = scmp.ne.s32.totalorder %s115, %s118
      %p124 = scmp.eq.s32.totalorder %s16, 0
      %p125 = por %p123, %p124
      %p126 = scmp.ne.s32.totalorder %s115, %s118
      %p127 = scmp.eq.s32.totalorder %s21, 1
      %p128 = por %p126, %p127
      %p129 = scmp.ne.s32.totalorder %s118, %s119
      %p130 = scmp.eq.s32.totalorder %s21, 0
      %p131 = por %p129, %p130
      %p132 = scmp.ne.s32.totalorder %s118, %s119
      %p133 = scmp.eq.s32.totalorder %s22, 1
      %p134 = por %p132, %p133
      %p136 = scmp.ne.s32.totalorder %s119, %s135
      %p137 = scmp.eq.s32.totalorder %s22, 0
      %p138 = por %p136, %p137
      %p139 = scmp.le.s32.totalorder 1, %s16
      %p140 = scmp.lt.s32.totalorder %s16, 3
      %p141 = pnand %p139, %p140
      %p142 = pneg %p141
      // Predicated region
      $region9: #{knowledge_model_forward_lane_dense.1} parent=5 // pred_check
        _
      $region10: #{knowledge_model_forward_lane_dense.1} parent=5 // pred_check_branch
        %144 = sbr.rel (%p141) target = $region12
      $region11: #{knowledge_model_forward_lane_dense.1} parent=5 // pred_region
        %s145 = ssub.s32 %s16, 1
        // Predicated region
        $region13: #{knowledge_model_forward_lane_dense.1} parent=11 // pred_check
          %p146 = pneg %p63
        $region14: #{knowledge_model_forward_lane_dense.1} parent=11 // pred_check_branch
          %148 = sbr.rel (%p146) target = $region16
        $region15: #{knowledge_model_forward_lane_dense.1} parent=11 // pred_region
          _
        $region16: #{knowledge_model_forward_lane_dense.1} parent=11 // pred_fallthru
          _
        // Predicated region
        $region17: #{knowledge_model_forward_lane_dense.1} parent=11 // pred_check
          %p149 = pneg %p84
        $region18: #{knowledge_model_forward_lane_dense.1} parent=11 // pred_check_branch
          %151 = sbr.rel (%p149) target = $region20
        $region19: #{knowledge_model_forward_lane_dense.1} parent=11 // pred_region
          _
        $region20: #{knowledge_model_forward_lane_dense.1} parent=11 // pred_fallthru
          _
        // Predicated region
        $region21: #{knowledge_model_forward_lane_dense.1} parent=11 // pred_check
          %p152 = pneg %p105
        $region22: #{knowledge_model_forward_lane_dense.1} parent=11 // pred_check_branch
          %154 = sbr.rel (%p152) target = $region24
        $region23: #{knowledge_model_forward_lane_dense.1} parent=11 // pred_region
          _
        $region24: #{knowledge_model_forward_lane_dense.1} parent=11 // pred_fallthru
          _
      $region12: #{knowledge_model_forward_lane_dense.1} parent=5 // pred_fallthru
        _
      %p155 = scmp.lt.s32.totalorder %s16, 2
      // Predicated region
      $region25: #{knowledge_model_forward_lane_dense.1} parent=5 // pred_check
        %p156 = pneg %p155
      $region26: #{knowledge_model_forward_lane_dense.1} parent=5 // pred_check_branch
        %158 = sbr.rel (%p156) target = $region28
      $region27: #{knowledge_model_forward_lane_dense.1} parent=5 // pred_region
        // Predicated region
        $region29: #{knowledge_model_forward_lane_dense.1} parent=27 // pred_check
          %p159 = pneg %p36
        $region30: #{knowledge_model_forward_lane_dense.1} parent=27 // pred_check_branch
          %161 = sbr.rel (%p159) target = $region32
        $region31: #{knowledge_model_forward_lane_dense.1} parent=27 // pred_region
          %s162 = sand.u32 %s26, 1
          %s163 = scalar_lea.sflag [#allocation3], %s162
          %s164 = sand.u32 %s26, 1
          %s165 = smul.addr %s164, 32
          %s166 = scalar_lea.vmem [#allocation2], %s165
          %s167 = smul.u32 8, %s16
          %169 = vsyncadd %s163, 0
          %s170 = smul.addr %s167, 4
          %s171 = scalar_lea.hbm %s0, %s170
          %s173 = sshll.u32 %s171, 4
          %s174 = int_to_ptr.hbm [resolvable:$true] %s173
          %s175 = sshll.u32 %s166, 4
          %s176 = int_to_ptr.vmem [resolvable:$true] %s175
          %178 = dma.hbm_to_vmem [thread:$0]  %s174, 512, %s176, %s163
        $region32: #{knowledge_model_forward_lane_dense.1} parent=27 // pred_fallthru
          _
      $region28: #{knowledge_model_forward_lane_dense.1} parent=5 // pred_fallthru
        _
      %p179 = scmp.le.s32.totalorder 1, %s16
      %p180 = scmp.lt.s32.totalorder %s16, 3
      %p181 = pnand %p179, %p180
      %p182 = pneg %p181
      // Predicated region
      $region33: #{knowledge_model_forward_lane_dense.1} parent=5 // pred_check
        _
      $region34: #{knowledge_model_forward_lane_dense.1} parent=5 // pred_check_branch
        %184 = sbr.rel (%p181) target = $region36
      $region35: #{knowledge_model_forward_lane_dense.1} parent=5 // pred_region
        %s185 = ssub.s32 %s16, 1
        %s186 = sand.u32 %s29, 1
        %s187 = scalar_lea.sflag [#allocation3], %s186
        %s188 = sand.u32 %s29, 1
        %s189 = smul.addr %s188, 32
        %s190 = scalar_lea.vmem [#allocation2], %s189
        // Predicated region
        $region37: #{knowledge_model_forward_lane_dense.1} parent=35 // pred_check
          %p191 = pneg %p42
        $region38: #{knowledge_model_forward_lane_dense.1} parent=35 // pred_check_branch
          %193 = sbr.rel (%p191) target = $region40
        $region39: #{knowledge_model_forward_lane_dense.1} parent=35 // pred_region
          %195 = dma.done %s187, 512
        $region40: #{knowledge_model_forward_lane_dense.1} parent=35 // pred_fallthru
          _
        %s196 = sand.u32 %s29, 1
        %s197 = scalar_lea.sflag [#allocation3], %s196
        %s198 = sand.u32 %s29, 1
        %s199 = smul.addr %s198, 32
        %s200 = scalar_lea.vmem [#allocation2], %s199
        %p201 = pneg %p42
        %p202 = pneg %p39
        %p203 = pneg %p63
        %p204 = pneg %p60
        %p205 = pneg %p84
        %p206 = pneg %p81
        %p207 = pneg %p105
        %p208 = pneg %p102
        %p209 = pneg %p131
        %p210 = pneg %p128
        %s211 = sand.u32 %s118, 1
        %s212 = scalar_lea.sflag [#allocation4], %s211
        %s213 = sand.u32 %s118, 1
        %s214 = smul.addr %s213, 32
        %s215 = scalar_lea.vmem [#allocation5], %s214
        %s216 = smul.u32 8, %s21
        %s217 = smul.u32 8, %s21
        %v218 = vld [vmem:[%s1] sm:$0xff]
        %v219 = vld [vmem:[%s1 + $0x8] sm:$0xff]
        %v220 = vld [vmem:[%s1 + $0x10] sm:$0xff]
        %v221 = vld [vmem:[%s1 + $0x18] sm:$0xff]
        %v222 = vld [vmem:[%s2] sm:$0xff]
        %v223 = vld [vmem:[%s3] sm:$0x7]
        %v224 = vld [vmem:[%s190] sm:$0x77]
        %v225 = vld [vmem:[%s190 + $0x8] sm:$0x77]
        %228 = vst [vmem:[#allocation1] ss:$2 sm:$0xff] %v224
        %s229 = scalar_lea.vmem [#allocation1], 16
        %230 = vst [vmem:[%s229] ss:$2 sm:$0xff] %v225
        %v231 = vld.sshfl [vmem:[#allocation1] sm:$0xff pattern:$0x75316420]
        %v232 = vld.sshfl [vmem:[#allocation1 + $0x8] sm:$0xff pattern:$0x75316420]
        %v233 = vld.sshfl [vmem:[#allocation1 + $0x10] sm:$0xff pattern:$0x75316420]
        %v234 = vld.sshfl [vmem:[#allocation1 + $0x18] sm:$0xff pattern:$0x75316420]
        %vm239 = vcmask 1042432
        %v240 = vsel %vm239, %v231, 0.0
        %v241 = vsel %vm239, %v232, 0.0
        %v242 = vsel %vm239, %v233, 0.0
        %v243 = vsel %vm239, %v234, 0.0
        %245 = vset.pattern.permute.xlu0 8
        %246 = vperm.xlu0 %245, %v218
        %v247 = vpop.permute.xlu0 %246
        %250 = vset.pattern.permute.xlu0 8
        %251 = vperm.xlu0 %250, %v219
        %v252 = vpop.permute.xlu0 %251
        %255 = vset.pattern.permute.xlu0 8
        %256 = vperm.xlu0 %255, %v220
        %v257 = vpop.permute.xlu0 %256
        %260 = vset.pattern.permute.xlu0 8
        %261 = vperm.xlu0 %260, %v221
        %v262 = vpop.permute.xlu0 %261
        %vm264 = vcmask 64512
        %v265 = vsel %vm264, %v218, 0
        %v267 = vsel %vm264, %v219, 0
        %v269 = vsel %vm264, %v220, 0
        %v271 = vsel %vm264, %v221, 0
        %273 = vmatpush.msra.mxu0 0.0
        %274 = vmatpush.msra.mxu0 0.0
        %275 = vmatpush.msra.mxu0 0.0
        %276 = vmatpush.msra.mxu0 0.0
        %277 = vmatpush.msra.mxu0 0.0
        %278 = vmatpush.msra.mxu0 0.0
        %279 = vmatpush.msra.mxu0 0.0
        %280 = vmatpush.msra.mxu0 0.0
        %281 = vmatpush.msra.mxu0 0.0
        %282 = vmatpush.msra.mxu0 0.0
        %283 = vmatpush.msra.mxu0 0.0
        %284 = vmatpush.msra.mxu0 0.0
        %285 = vmatpush.msra.mxu0 0.0
        %286 = vmatpush.msra.mxu0 0.0
        %287 = vmatpush.msra.mxu0 0.0
        %288 = vmatpush.msra.mxu0 %v240
        %289 = vmatmul.f32.gmra.mxu0 %v265
        %v290 = vpop.f32.mrf.mxu0
        %v291 = vadd.f32 %v247, %v290
        %292 = vmatmul.f32.gmra.mxu0 %v267
        %v293 = vpop.f32.mrf.mxu0
        %v294 = vadd.f32 %v252, %v293
        %295 = vmatmul.f32.gmra.mxu0 %v269
        %v296 = vpop.f32.mrf.mxu0
        %v297 = vadd.f32 %v257, %v296
        %298 = vmatmul.f32.gmra.mxu0 %v271
        %v299 = vpop.f32.mrf.mxu0
        %v300 = vadd.f32 %v262, %v299
        %301 = vdwg.mxu0
        %302 = vmatpush.msra.mxu0 0.0
        %303 = vmatpush.msra.mxu0 0.0
        %304 = vmatpush.msra.mxu0 0.0
        %305 = vmatpush.msra.mxu0 0.0
        %306 = vmatpush.msra.mxu0 0.0
        %307 = vmatpush.msra.mxu0 0.0
        %308 = vmatpush.msra.mxu0 0.0
        %309 = vmatpush.msra.mxu0 0.0
        %310 = vmatpush.msra.mxu0 0.0
        %311 = vmatpush.msra.mxu0 0.0
        %312 = vmatpush.msra.mxu0 0.0
        %313 = vmatpush.msra.mxu0 0.0
        %314 = vmatpush.msra.mxu0 0.0
        %315 = vmatpush.msra.mxu0 0.0
        %316 = vmatpush.msra.mxu0 0.0
        %317 = vmatpush.msra.mxu0 %v241
        %318 = vmatmul.f32.gmra.mxu0 %v265
        %v319 = vpop.f32.mrf.mxu0
        %v320 = vadd.f32 %v247, %v319
        %321 = vmatmul.f32.gmra.mxu0 %v267
        %v322 = vpop.f32.mrf.mxu0
        %v323 = vadd.f32 %v252, %v322
        %324 = vmatmul.f32.gmra.mxu0 %v269
        %v325 = vpop.f32.mrf.mxu0
        %v326 = vadd.f32 %v257, %v325
        %327 = vmatmul.f32.gmra.mxu0 %v271
        %v328 = vpop.f32.mrf.mxu0
        %v329 = vadd.f32 %v262, %v328
        %330 = vdwg.mxu0
        %331 = vmatpush.msra.mxu0 0.0
        %332 = vmatpush.msra.mxu0 0.0
        %333 = vmatpush.msra.mxu0 0.0
        %334 = vmatpush.msra.mxu0 0.0
        %335 = vmatpush.msra.mxu0 0.0
        %336 = vmatpush.msra.mxu0 0.0
        %337 = vmatpush.msra.mxu0 0.0
        %338 = vmatpush.msra.mxu0 0.0
        %339 = vmatpush.msra.mxu0 0.0
        %340 = vmatpush.msra.mxu0 0.0
        %341 = vmatpush.msra.mxu0 0.0
        %342 = vmatpush.msra.mxu0 0.0
        %343 = vmatpush.msra.mxu0 0.0
        %344 = vmatpush.msra.mxu0 0.0
        %345 = vmatpush.msra.mxu0 0.0
        %346 = vmatpush.msra.mxu0 %v242
        %347 = vmatmul.f32.gmra.mxu0 %v265
        %v348 = vpop.f32.mrf.mxu0
        %v349 = vadd.f32 %v247, %v348
        %350 = vmatmul.f32.gmra.mxu0 %v267
        %v351 = vpop.f32.mrf.mxu0
        %v352 = vadd.f32 %v252, %v351
        %353 = vmatmul.f32.gmra.mxu0 %v269
        %v354 = vpop.f32.mrf.mxu0
        %v355 = vadd.f32 %v257, %v354
        %356 = vmatmul.f32.gmra.mxu0 %v271
        %v357 = vpop.f32.mrf.mxu0
        %v358 = vadd.f32 %v262, %v357
        %359 = vdwg.mxu0
        %360 = vmatpush.msra.mxu0 0.0
        %361 = vmatpush.msra.mxu0 0.0
        %362 = vmatpush.msra.mxu0 0.0
        %363 = vmatpush.msra.mxu0 0.0
        %364 = vmatpush.msra.mxu0 0.0
        %365 = vmatpush.msra.mxu0 0.0
        %366 = vmatpush.msra.mxu0 0.0
        %367 = vmatpush.msra.mxu0 0.0
        %368 = vmatpush.msra.mxu0 0.0
        %369 = vmatpush.msra.mxu0 0.0
        %370 = vmatpush.msra.mxu0 0.0
        %371 = vmatpush.msra.mxu0 0.0
        %372 = vmatpush.msra.mxu0 0.0
        %373 = vmatpush.msra.mxu0 0.0
        %374 = vmatpush.msra.mxu0 0.0
        %375 = vmatpush.msra.mxu0 %v243
        %376 = vmatmul.f32.gmra.mxu0 %v265
        %v377 = vpop.f32.mrf.mxu0
        %v378 = vadd.f32 %v247, %v377
        %379 = vmatmul.f32.gmra.mxu0 %v267
        %v380 = vpop.f32.mrf.mxu0
        %v381 = vadd.f32 %v252, %v380
        %382 = vmatmul.f32.gmra.mxu0 %v269
        %v383 = vpop.f32.mrf.mxu0
        %v384 = vadd.f32 %v257, %v383
        %385 = vmatmul.f32.gmra.mxu0 %v271
        %v386 = vpop.f32.mrf.mxu0
        %v387 = vadd.f32 %v262, %v386
        %388 = vdwg.mxu0
        %vm389 = vcmp.gt.f32.partialorder %v291, 0.0
        %vm390 = vcmp.gt.f32.partialorder %v320, 0.0
        %vm391 = vcmp.gt.f32.partialorder %v349, 0.0
        %vm392 = vcmp.gt.f32.partialorder %v378, 0.0
        %vm393 = vcmp.gt.f32.partialorder %v294, 0.0
        %vm394 = vcmp.gt.f32.partialorder %v323, 0.0
        %vm395 = vcmp.gt.f32.partialorder %v352, 0.0
        %vm396 = vcmp.gt.f32.partialorder %v381, 0.0
        %vm397 = vcmp.gt.f32.partialorder %v297, 0.0
        %vm398 = vcmp.gt.f32.partialorder %v326, 0.0
        %vm399 = vcmp.gt.f32.partialorder %v355, 0.0
        %vm400 = vcmp.gt.f32.partialorder %v384, 0.0
        %vm401 = vcmp.gt.f32.partialorder %v300, 0.0
        %vm402 = vcmp.gt.f32.partialorder %v329, 0.0
        %vm403 = vcmp.gt.f32.partialorder %v358, 0.0
        %vm404 = vcmp.gt.f32.partialorder %v387, 0.0
        %v405 = vmul.f32 %v291, 0.01
        %v406 = vmul.f32 %v320, 0.01
        %v407 = vmul.f32 %v349, 0.01
        %v408 = vmul.f32 %v378, 0.01
        %v409 = vmul.f32 %v294, 0.01
        %v410 = vmul.f32 %v323, 0.01
        %v411 = vmul.f32 %v352, 0.01
        %v412 = vmul.f32 %v381, 0.01
        %v413 = vmul.f32 %v297, 0.01
        %v414 = vmul.f32 %v326, 0.01
        %v415 = vmul.f32 %v355, 0.01
        %v416 = vmul.f32 %v384, 0.01
        %v417 = vmul.f32 %v300, 0.01
        %v418 = vmul.f32 %v329, 0.01
        %v419 = vmul.f32 %v358, 0.01
        %v420 = vmul.f32 %v387, 0.01
        %v421 = vsel %vm389, %v291, %v405
        %v422 = vsel %vm390, %v320, %v406
        %v423 = vsel %vm391, %v349, %v407
        %v424 = vsel %vm392, %v378, %v408
        %v425 = vsel %vm393, %v294, %v409
        %v426 = vsel %vm394, %v323, %v410
        %v427 = vsel %vm395, %v352, %v411
        %v428 = vsel %vm396, %v381, %v412
        %v429 = vsel %vm397, %v297, %v413
        %v430 = vsel %vm398, %v326, %v414
        %v431 = vsel %vm399, %v355, %v415
        %v432 = vsel %vm400, %v384, %v416
        %v433 = vsel %vm401, %v300, %v417
        %v434 = vsel %vm402, %v329, %v418
        %v435 = vsel %vm403, %v358, %v419
        %v436 = vsel %vm404, %v387, %v420
        %438 = vrot.lane.b32.xlu0 %v222, 96
        %v439 = vpop.permute.xlu0 %438
        %v440 = vsel %vm264, %v439, 0
        %442 = vmatpush.msra.mxu0 0.0
        %443 = vmatpush.msra.mxu0 0.0
        %444 = vmatpush.msra.mxu0 0.0
        %445 = vmatpush.msra.mxu0 0.0
        %446 = vmatpush.msra.mxu0 0.0
        %447 = vmatpush.msra.mxu0 0.0
        %448 = vmatpush.msra.mxu0 0.0
        %449 = vmatpush.msra.mxu0 0.0
        %450 = vmatpush.msra.mxu0 0.0
        %451 = vmatpush.msra.mxu0 0.0
        %452 = vmatpush.msra.mxu0 0.0
        %453 = vmatpush.msra.mxu0 0.0
        %454 = vmatpush.msra.mxu0 0.0
        %455 = vmatpush.msra.mxu0 0.0
        %456 = vmatpush.msra.mxu0 0.0
        %457 = vmatpush.msra.mxu0 %v240
        %458 = vmatmul.f32.gmra.mxu0 %v440
        %v459 = vpop.f32.mrf.mxu0
        %v460 = vadd.f32 0.0, %v459
        %461 = vdwg.mxu0
        %462 = vmatpush.msra.mxu0 0.0
        %463 = vmatpush.msra.mxu0 0.0
        %464 = vmatpush.msra.mxu0 0.0
        %465 = vmatpush.msra.mxu0 0.0
        %466 = vmatpush.msra.mxu0 0.0
        %467 = vmatpush.msra.mxu0 0.0
        %468 = vmatpush.msra.mxu0 0.0
        %469 = vmatpush.msra.mxu0 0.0
        %470 = vmatpush.msra.mxu0 0.0
        %471 = vmatpush.msra.mxu0 0.0
        %472 = vmatpush.msra.mxu0 0.0
        %473 = vmatpush.msra.mxu0 0.0
        %474 = vmatpush.msra.mxu0 0.0
        %475 = vmatpush.msra.mxu0 0.0
        %476 = vmatpush.msra.mxu0 0.0
        %477 = vmatpush.msra.mxu0 %v241
        %478 = vmatmul.f32.gmra.mxu0 %v440
        %v479 = vpop.f32.mrf.mxu0
        %v480 = vadd.f32 0.0, %v479
        %481 = vdwg.mxu0
        %482 = vmatpush.msra.mxu0 0.0
        %483 = vmatpush.msra.mxu0 0.0
        %484 = vmatpush.msra.mxu0 0.0
        %485 = vmatpush.msra.mxu0 0.0
        %486 = vmatpush.msra.mxu0 0.0
        %487 = vmatpush.msra.mxu0 0.0
        %488 = vmatpush.msra.mxu0 0.0
        %489 = vmatpush.msra.mxu0 0.0
        %490 = vmatpush.msra.mxu0 0.0
        %491 = vmatpush.msra.mxu0 0.0
        %492 = vmatpush.msra.mxu0 0.0
        %493 = vmatpush.msra.mxu0 0.0
        %494 = vmatpush.msra.mxu0 0.0
        %495 = vmatpush.msra.mxu0 0.0
        %496 = vmatpush.msra.mxu0 0.0
        %497 = vmatpush.msra.mxu0 %v242
        %498 = vmatmul.f32.gmra.mxu0 %v440
        %v499 = vpop.f32.mrf.mxu0
        %v500 = vadd.f32 0.0, %v499
        %501 = vdwg.mxu0
        %502 = vmatpush.msra.mxu0 0.0
        %503 = vmatpush.msra.mxu0 0.0
        %504 = vmatpush.msra.mxu0 0.0
        %505 = vmatpush.msra.mxu0 0.0
        %506 = vmatpush.msra.mxu0 0.0
        %507 = vmatpush.msra.mxu0 0.0
        %508 = vmatpush.msra.mxu0 0.0
        %509 = vmatpush.msra.mxu0 0.0
        %510 = vmatpush.msra.mxu0 0.0
        %511 = vmatpush.msra.mxu0 0.0
        %512 = vmatpush.msra.mxu0 0.0
        %513 = vmatpush.msra.mxu0 0.0
        %514 = vmatpush.msra.mxu0 0.0
        %515 = vmatpush.msra.mxu0 0.0
        %516 = vmatpush.msra.mxu0 0.0
        %517 = vmatpush.msra.mxu0 %v243
        %518 = vmatmul.f32.gmra.mxu0 %v440
        %v519 = vpop.f32.mrf.mxu0
        %v520 = vadd.f32 0.0, %v519
        %521 = vdwg.mxu0
        %vm522 = vcmask 261120
        %v523 = vsel %vm522, %v222, 0
        %525 = vmatpush.msra.mxu0 0.0
        %526 = vmatpush.msra.mxu0 0.0
        %527 = vmatpush.msra.mxu0 0.0
        %528 = vmatpush.msra.mxu0 0.0
        %529 = vmatpush.msra.mxu0 0.0
        %530 = vmatpush.msra.mxu0 0.0
        %531 = vmatpush.msra.mxu0 0.0
        %532 = vmatpush.msra.mxu0 0.0
        %533 = vmatpush.msra.mxu0 0.0
        %534 = vmatpush.msra.mxu0 0.0
        %535 = vmatpush.msra.mxu0 0.0
        %536 = vmatpush.msra.mxu0 0.0
        %537 = vmatpush.msra.mxu0 %v433
        %538 = vmatpush.msra.mxu0 %v429
        %539 = vmatpush.msra.mxu0 %v425
        %540 = vmatpush.msra.mxu0 %v421
        %541 = vmatmul.f32.gmra.mxu0 %v523
        %v542 = vpop.f32.mrf.mxu0
        %v543 = vadd.f32 %v460, %v542
        %544 = vdwg.mxu0
        %545 = vmatpush.msra.mxu0 0.0
        %546 = vmatpush.msra.mxu0 0.0
        %547 = vmatpush.msra.mxu0 0.0
        %548 = vmatpush.msra.mxu0 0.0
        %549 = vmatpush.msra.mxu0 0.0
        %550 = vmatpush.msra.mxu0 0.0
        %551 = vmatpush.msra.mxu0 0.0
        %552 = vmatpush.msra.mxu0 0.0
        %553 = vmatpush.msra.mxu0 0.0
        %554 = vmatpush.msra.mxu0 0.0
        %555 = vmatpush.msra.mxu0 0.0
        %556 = vmatpush.msra.mxu0 0.0
        %557 = vmatpush.msra.mxu0 %v434
        %558 = vmatpush.msra.mxu0 %v430
        %559 = vmatpush.msra.mxu0 %v426
        %560 = vmatpush.msra.mxu0 %v422
        %561 = vmatmul.f32.gmra.mxu0 %v523
        %v562 = vpop.f32.mrf.mxu0
        %v563 = vadd.f32 %v480, %v562
        %564 = vdwg.mxu0
        %565 = vmatpush.msra.mxu0 0.0
        %566 = vmatpush.msra.mxu0 0.0
        %567 = vmatpush.msra.mxu0 0.0
        %568 = vmatpush.msra.mxu0 0.0
        %569 = vmatpush.msra.mxu0 0.0
        %570 = vmatpush.msra.mxu0 0.0
        %571 = vmatpush.msra.mxu0 0.0
        %572 = vmatpush.msra.mxu0 0.0
        %573 = vmatpush.msra.mxu0 0.0
        %574 = vmatpush.msra.mxu0 0.0
        %575 = vmatpush.msra.mxu0 0.0
        %576 = vmatpush.msra.mxu0 0.0
        %577 = vmatpush.msra.mxu0 %v435
        %578 = vmatpush.msra.mxu0 %v431
        %579 = vmatpush.msra.mxu0 %v427
        %580 = vmatpush.msra.mxu0 %v423
        %581 = vmatmul.f32.gmra.mxu0 %v523
        %v582 = vpop.f32.mrf.mxu0
        %v583 = vadd.f32 %v500, %v582
        %584 = vdwg.mxu0
        %585 = vmatpush.msra.mxu0 0.0
        %586 = vmatpush.msra.mxu0 0.0
        %587 = vmatpush.msra.mxu0 0.0
        %588 = vmatpush.msra.mxu0 0.0
        %589 = vmatpush.msra.mxu0 0.0
        %590 = vmatpush.msra.mxu0 0.0
        %591 = vmatpush.msra.mxu0 0.0
        %592 = vmatpush.msra.mxu0 0.0
        %593 = vmatpush.msra.mxu0 0.0
        %594 = vmatpush.msra.mxu0 0.0
        %595 = vmatpush.msra.mxu0 0.0
        %596 = vmatpush.msra.mxu0 0.0
        %597 = vmatpush.msra.mxu0 %v436
        %598 = vmatpush.msra.mxu0 %v432
        %599 = vmatpush.msra.mxu0 %v428
        %600 = vmatpush.msra.mxu0 %v424
        %601 = vmatmul.f32.gmra.mxu0 %v523
        %v602 = vpop.f32.mrf.mxu0
        %v603 = vadd.f32 %v520, %v602
        %604 = vdwg.mxu0
        %606 = vset.pattern.permute.xlu0 0
        %607 = vperm.xlu0 %606, %v223
        %v608 = vpop.permute.xlu0 %607
        %v610 = vadd.f32 %v543, %v608
        %v611 = vadd.f32 %v563, %v608
        %v612 = vadd.f32 %v583, %v608
        %v613 = vadd.f32 %v603, %v608
        %v618 = vrot.slane %v611, 4
        %v619 = vrot.slane %v613, 4
        %vm620 = vcmask 1043456
        %v621 = vsel %vm620, %v610, %v618
        %v622 = vsel %vm620, %v612, %v619
        %625 = vst [vmem:[%s215] sm:$0x77] %v621
        %626 = vst [vmem:[%s215 + $0x8] sm:$0x77] %v622
        %s627 = scalar_lea.vmem %s190, 16 [#allocation2]
        %v628 = vld [vmem:[%s627] sm:$0x77]
        %v629 = vld [vmem:[%s627 + $0x8] sm:$0x77]
        %632 = vst [vmem:[#allocation1] ss:$2 sm:$0xff] %v628
        %s633 = scalar_lea.vmem [#allocation1], 16
        %634 = vst [vmem:[%s633] ss:$2 sm:$0xff] %v629
        %v635 = vld.sshfl [vmem:[#allocation1] sm:$0xff pattern:$0x75316420]
        %v636 = vld.sshfl [vmem:[#allocation1 + $0x8] sm:$0xff pattern:$0x75316420]
        %v637 = vld.sshfl [vmem:[#allocation1 + $0x10] sm:$0xff pattern:$0x75316420]
        %v638 = vld.sshfl [vmem:[#allocation1 + $0x18] sm:$0xff pattern:$0x75316420]
        %v643 = vsel %vm239, %v635, 0.0
        %v644 = vsel %vm239, %v636, 0.0
        %v645 = vsel %vm239, %v637, 0.0
        %v646 = vsel %vm239, %v638, 0.0
        %647 = vmatpush.msra.mxu0 0.0
        %648 = vmatpush.msra.mxu0 0.0
        %649 = vmatpush.msra.mxu0 0.0
        %650 = vmatpush.msra.mxu0 0.0
        %651 = vmatpush.msra.mxu0 0.0
        %652 = vmatpush.msra.mxu0 0.0
        %653 = vmatpush.msra.mxu0 0.0
        %654 = vmatpush.msra.mxu0 0.0
        %655 = vmatpush.msra.mxu0 0.0
        %656 = vmatpush.msra.mxu0 0.0
        %657 = vmatpush.msra.mxu0 0.0
        %658 = vmatpush.msra.mxu0 0.0
        %659 = vmatpush.msra.mxu0 0.0
        %660 = vmatpush.msra.mxu0 0.0
        %661 = vmatpush.msra.mxu0 0.0
        %662 = vmatpush.msra.mxu0 %v643
        %663 = vmatmul.f32.gmra.mxu0 %v265
        %v664 = vpop.f32.mrf.mxu0
        %v665 = vadd.f32 %v247, %v664
        %666 = vmatmul.f32.gmra.mxu0 %v267
        %v667 = vpop.f32.mrf.mxu0
        %v668 = vadd.f32 %v252, %v667
        %669 = vmatmul.f32.gmra.mxu0 %v269
        %v670 = vpop.f32.mrf.mxu0
        %v671 = vadd.f32 %v257, %v670
        %672 = vmatmul.f32.gmra.mxu0 %v271
        %v673 = vpop.f32.mrf.mxu0
        %v674 = vadd.f32 %v262, %v673
        %675 = vdwg.mxu0
        %676 = vmatpush.msra.mxu0 0.0
        %677 = vmatpush.msra.mxu0 0.0
        %678 = vmatpush.msra.mxu0 0.0
        %679 = vmatpush.msra.mxu0 0.0
        %680 = vmatpush.msra.mxu0 0.0
        %681 = vmatpush.msra.mxu0 0.0
        %682 = vmatpush.msra.mxu0 0.0
        %683 = vmatpush.msra.mxu0 0.0
        %684 = vmatpush.msra.mxu0 0.0
        %685 = vmatpush.msra.mxu0 0.0
        %686 = vmatpush.msra.mxu0 0.0
        %687 = vmatpush.msra.mxu0 0.0
        %688 = vmatpush.msra.mxu0 0.0
        %689 = vmatpush.msra.mxu0 0.0
        %690 = vmatpush.msra.mxu0 0.0
        %691 = vmatpush.msra.mxu0 %v644
        %692 = vmatmul.f32.gmra.mxu0 %v265
        %v693 = vpop.f32.mrf.mxu0
        %v694 = vadd.f32 %v247, %v693
        %695 = vmatmul.f32.gmra.mxu0 %v267
        %v696 = vpop.f32.mrf.mxu0
        %v697 = vadd.f32 %v252, %v696
        %698 = vmatmul.f32.gmra.mxu0 %v269
        %v699 = vpop.f32.mrf.mxu0
        %v700 = vadd.f32 %v257, %v699
        %701 = vmatmul.f32.gmra.mxu0 %v271
        %v702 = vpop.f32.mrf.mxu0
        %v703 = vadd.f32 %v262, %v702
        %704 = vdwg.mxu0
        %705 = vmatpush.msra.mxu0 0.0
        %706 = vmatpush.msra.mxu0 0.0
        %707 = vmatpush.msra.mxu0 0.0
        %708 = vmatpush.msra.mxu0 0.0
        %709 = vmatpush.msra.mxu0 0.0
        %710 = vmatpush.msra.mxu0 0.0
        %711 = vmatpush.msra.mxu0 0.0
        %712 = vmatpush.msra.mxu0 0.0
        %713 = vmatpush.msra.mxu0 0.0
        %714 = vmatpush.msra.mxu0 0.0
        %715 = vmatpush.msra.mxu0 0.0
        %716 = vmatpush.msra.mxu0 0.0
        %717 = vmatpush.msra.mxu0 0.0
        %718 = vmatpush.msra.mxu0 0.0
        %719 = vmatpush.msra.mxu0 0.0
        %720 = vmatpush.msra.mxu0 %v645
        %721 = vmatmul.f32.gmra.mxu0 %v265
        %v722 = vpop.f32.mrf.mxu0
        %v723 = vadd.f32 %v247, %v722
        %724 = vmatmul.f32.gmra.mxu0 %v267
        %v725 = vpop.f32.mrf.mxu0
        %v726 = vadd.f32 %v252, %v725
        %727 = vmatmul.f32.gmra.mxu0 %v269
        %v728 = vpop.f32.mrf.mxu0
        %v729 = vadd.f32 %v257, %v728
        %730 = vmatmul.f32.gmra.mxu0 %v271
        %v731 = vpop.f32.mrf.mxu0
        %v732 = vadd.f32 %v262, %v731
        %733 = vdwg.mxu0
        %734 = vmatpush.msra.mxu0 0.0
        %735 = vmatpush.msra.mxu0 0.0
        %736 = vmatpush.msra.mxu0 0.0
        %737 = vmatpush.msra.mxu0 0.0
        %738 = vmatpush.msra.mxu0 0.0
        %739 = vmatpush.msra.mxu0 0.0
        %740 = vmatpush.msra.mxu0 0.0
        %741 = vmatpush.msra.mxu0 0.0
        %742 = vmatpush.msra.mxu0 0.0
        %743 = vmatpush.msra.mxu0 0.0
        %744 = vmatpush.msra.mxu0 0.0
        %745 = vmatpush.msra.mxu0 0.0
        %746 = vmatpush.msra.mxu0 0.0
        %747 = vmatpush.msra.mxu0 0.0
        %748 = vmatpush.msra.mxu0 0.0
        %749 = vmatpush.msra.mxu0 %v646
        %750 = vmatmul.f32.gmra.mxu0 %v265
        %v751 = vpop.f32.mrf.mxu0
        %v752 = vadd.f32 %v247, %v751
        %753 = vmatmul.f32.gmra.mxu0 %v267
        %v754 = vpop.f32.mrf.mxu0
        %v755 = vadd.f32 %v252, %v754
        %756 = vmatmul.f32.gmra.mxu0 %v269
        %v757 = vpop.f32.mrf.mxu0
        %v758 = vadd.f32 %v257, %v757
        %759 = vmatmul.f32.gmra.mxu0 %v271
        %v760 = vpop.f32.mrf.mxu0
        %v761 = vadd.f32 %v262, %v760
        %762 = vdwg.mxu0
        %vm763 = vcmp.gt.f32.partialorder %v665, 0.0
        %vm764 = vcmp.gt.f32.partialorder %v694, 0.0
        %vm765 = vcmp.gt.f32.partialorder %v723, 0.0
        %vm766 = vcmp.gt.f32.partialorder %v752, 0.0
        %vm767 = vcmp.gt.f32.partialorder %v668, 0.0
        %vm768 = vcmp.gt.f32.partialorder %v697, 0.0
        %vm769 = vcmp.gt.f32.partialorder %v726, 0.0
        %vm770 = vcmp.gt.f32.partialorder %v755, 0.0
        %vm771 = vcmp.gt.f32.partialorder %v671, 0.0
        %vm772 = vcmp.gt.f32.partialorder %v700, 0.0
        %vm773 = vcmp.gt.f32.partialorder %v729, 0.0
        %vm774 = vcmp.gt.f32.partialorder %v758, 0.0
        %vm775 = vcmp.gt.f32.partialorder %v674, 0.0
        %vm776 = vcmp.gt.f32.partialorder %v703, 0.0
        %vm777 = vcmp.gt.f32.partialorder %v732, 0.0
        %vm778 = vcmp.gt.f32.partialorder %v761, 0.0
        %v779 = vmul.f32 %v665, 0.01
        %v780 = vmul.f32 %v694, 0.01
        %v781 = vmul.f32 %v723, 0.01
        %v782 = vmul.f32 %v752, 0.01
        %v783 = vmul.f32 %v668, 0.01
        %v784 = vmul.f32 %v697, 0.01
        %v785 = vmul.f32 %v726, 0.01
        %v786 = vmul.f32 %v755, 0.01
        %v787 = vmul.f32 %v671, 0.01
        %v788 = vmul.f32 %v700, 0.01
        %v789 = vmul.f32 %v729, 0.01
        %v790 = vmul.f32 %v758, 0.01
        %v791 = vmul.f32 %v674, 0.01
        %v792 = vmul.f32 %v703, 0.01
        %v793 = vmul.f32 %v732, 0.01
        %v794 = vmul.f32 %v761, 0.01
        %v795 = vsel %vm763, %v665, %v779
        %v796 = vsel %vm764, %v694, %v780
        %v797 = vsel %vm765, %v723, %v781
        %v798 = vsel %vm766, %v752, %v782
        %v799 = vsel %vm767, %v668, %v783
        %v800 = vsel %vm768, %v697, %v784
        %v801 = vsel %vm769, %v726, %v785
        %v802 = vsel %vm770, %v755, %v786
        %v803 = vsel %vm771, %v671, %v787
        %v804 = vsel %vm772, %v700, %v788
        %v805 = vsel %vm773, %v729, %v789
        %v806 = vsel %vm774, %v758, %v790
        %v807 = vsel %vm775, %v674, %v791
        %v808 = vsel %vm776, %v703, %v792
        %v809 = vsel %vm777, %v732, %v793
        %v810 = vsel %vm778, %v761, %v794
        %811 = vmatpush.msra.mxu0 0.0
        %812 = vmatpush.msra.mxu0 0.0
        %813 = vmatpush.msra.mxu0 0.0
        %814 = vmatpush.msra.mxu0 0.0
        %815 = vmatpush.msra.mxu0 0.0
        %816 = vmatpush.msra.mxu0 0.0
        %817 = vmatpush.msra.mxu0 0.0
        %818 = vmatpush.msra.mxu0 0.0
        %819 = vmatpush.msra.mxu0 0.0
        %820 = vmatpush.msra.mxu0 0.0
        %821 = vmatpush.msra.mxu0 0.0
        %822 = vmatpush.msra.mxu0 0.0
        %823 = vmatpush.msra.mxu0 0.0
        %824 = vmatpush.msra.mxu0 0.0
        %825 = vmatpush.msra.mxu0 0.0
        %826 = vmatpush.msra.mxu0 %v643
        %827 = vmatmul.f32.gmra.mxu0 %v440
        %v828 = vpop.f32.mrf.mxu0
        %v829 = vadd.f32 0.0, %v828
        %830 = vdwg.mxu0
        %831 = vmatpush.msra.mxu0 0.0
        %832 = vmatpush.msra.mxu0 0.0
        %833 = vmatpush.msra.mxu0 0.0
        %834 = vmatpush.msra.mxu0 0.0
        %835 = vmatpush.msra.mxu0 0.0
        %836 = vmatpush.msra.mxu0 0.0
        %837 = vmatpush.msra.mxu0 0.0
        %838 = vmatpush.msra.mxu0 0.0
        %839 = vmatpush.msra.mxu0 0.0
        %840 = vmatpush.msra.mxu0 0.0
        %841 = vmatpush.msra.mxu0 0.0
        %842 = vmatpush.msra.mxu0 0.0
        %843 = vmatpush.msra.mxu0 0.0
        %844 = vmatpush.msra.mxu0 0.0
        %845 = vmatpush.msra.mxu0 0.0
        %846 = vmatpush.msra.mxu0 %v644
        %847 = vmatmul.f32.gmra.mxu0 %v440
        %v848 = vpop.f32.mrf.mxu0
        %v849 = vadd.f32 0.0, %v848
        %850 = vdwg.mxu0
        %851 = vmatpush.msra.mxu0 0.0
        %852 = vmatpush.msra.mxu0 0.0
        %853 = vmatpush.msra.mxu0 0.0
        %854 = vmatpush.msra.mxu0 0.0
        %855 = vmatpush.msra.mxu0 0.0
        %856 = vmatpush.msra.mxu0 0.0
        %857 = vmatpush.msra.mxu0 0.0
        %858 = vmatpush.msra.mxu0 0.0
        %859 = vmatpush.msra.mxu0 0.0
        %860 = vmatpush.msra.mxu0 0.0
        %861 = vmatpush.msra.mxu0 0.0
        %862 = vmatpush.msra.mxu0 0.0
        %863 = vmatpush.msra.mxu0 0.0
        %864 = vmatpush.msra.mxu0 0.0
        %865 = vmatpush.msra.mxu0 0.0
        %866 = vmatpush.msra.mxu0 %v645
        %867 = vmatmul.f32.gmra.mxu0 %v440
        %v868 = vpop.f32.mrf.mxu0
        %v869 = vadd.f32 0.0, %v868
        %870 = vdwg.mxu0
        %871 = vmatpush.msra.mxu0 0.0
        %872 = vmatpush.msra.mxu0 0.0
        %873 = vmatpush.msra.mxu0 0.0
        %874 = vmatpush.msra.mxu0 0.0
        %875 = vmatpush.msra.mxu0 0.0
        %876 = vmatpush.msra.mxu0 0.0
        %877 = vmatpush.msra.mxu0 0.0
        %878 = vmatpush.msra.mxu0 0.0
        %879 = vmatpush.msra.mxu0 0.0
        %880 = vmatpush.msra.mxu0 0.0
        %881 = vmatpush.msra.mxu0 0.0
        %882 = vmatpush.msra.mxu0 0.0
        %883 = vmatpush.msra.mxu0 0.0
        %884 = vmatpush.msra.mxu0 0.0
        %885 = vmatpush.msra.mxu0 0.0
        %886 = vmatpush.msra.mxu0 %v646
        %887 = vmatmul.f32.gmra.mxu0 %v440
        %v888 = vpop.f32.mrf.mxu0
        %v889 = vadd.f32 0.0, %v888
        %890 = vdwg.mxu0
        %891 = vmatpush.msra.mxu0 0.0
        %892 = vmatpush.msra.mxu0 0.0
        %893 = vmatpush.msra.mxu0 0.0
        %894 = vmatpush.msra.mxu0 0.0
        %895 = vmatpush.msra.mxu0 0.0
        %896 = vmatpush.msra.mxu0 0.0
        %897 = vmatpush.msra.mxu0 0.0
        %898 = vmatpush.msra.mxu0 0.0
        %899 = vmatpush.msra.mxu0 0.0
        %900 = vmatpush.msra.mxu0 0.0
        %901 = vmatpush.msra.mxu0 0.0
        %902 = vmatpush.msra.mxu0 0.0
        %903 = vmatpush.msra.mxu0 %v807
        %904 = vmatpush.msra.mxu0 %v803
        %905 = vmatpush.msra.mxu0 %v799
        %906 = vmatpush.msra.mxu0 %v795
        %907 = vmatmul.f32.gmra.mxu0 %v523
        %v908 = vpop.f32.mrf.mxu0
        %v909 = vadd.f32 %v829, %v908
        %910 = vdwg.mxu0
        %911 = vmatpush.msra.mxu0 0.0
        %912 = vmatpush.msra.mxu0 0.0
        %913 = vmatpush.msra.mxu0 0.0
        %914 = vmatpush.msra.mxu0 0.0
        %915 = vmatpush.msra.mxu0 0.0
        %916 = vmatpush.msra.mxu0 0.0
        %917 = vmatpush.msra.mxu0 0.0
        %918 = vmatpush.msra.mxu0 0.0
        %919 = vmatpush.msra.mxu0 0.0
        %920 = vmatpush.msra.mxu0 0.0
        %921 = vmatpush.msra.mxu0 0.0
        %922 = vmatpush.msra.mxu0 0.0
        %923 = vmatpush.msra.mxu0 %v808
        %924 = vmatpush.msra.mxu0 %v804
        %925 = vmatpush.msra.mxu0 %v800
        %926 = vmatpush.msra.mxu0 %v796
        %927 = vmatmul.f32.gmra.mxu0 %v523
        %v928 = vpop.f32.mrf.mxu0
        %v929 = vadd.f32 %v849, %v928
        %930 = vdwg.mxu0
        %931 = vmatpush.msra.mxu0 0.0
        %932 = vmatpush.msra.mxu0 0.0
        %933 = vmatpush.msra.mxu0 0.0
        %934 = vmatpush.msra.mxu0 0.0
        %935 = vmatpush.msra.mxu0 0.0
        %936 = vmatpush.msra.mxu0 0.0
        %937 = vmatpush.msra.mxu0 0.0
        %938 = vmatpush.msra.mxu0 0.0
        %939 = vmatpush.msra.mxu0 0.0
        %940 = vmatpush.msra.mxu0 0.0
        %941 = vmatpush.msra.mxu0 0.0
        %942 = vmatpush.msra.mxu0 0.0
        %943 = vmatpush.msra.mxu0 %v809
        %944 = vmatpush.msra.mxu0 %v805
        %945 = vmatpush.msra.mxu0 %v801
        %946 = vmatpush.msra.mxu0 %v797
        %947 = vmatmul.f32.gmra.mxu0 %v523
        %v948 = vpop.f32.mrf.mxu0
        %v949 = vadd.f32 %v869, %v948
        %950 = vdwg.mxu0
        %951 = vmatpush.msra.mxu0 0.0
        %952 = vmatpush.msra.mxu0 0.0
        %953 = vmatpush.msra.mxu0 0.0
        %954 = vmatpush.msra.mxu0 0.0
        %955 = vmatpush.msra.mxu0 0.0
        %956 = vmatpush.msra.mxu0 0.0
        %957 = vmatpush.msra.mxu0 0.0
        %958 = vmatpush.msra.mxu0 0.0
        %959 = vmatpush.msra.mxu0 0.0
        %960 = vmatpush.msra.mxu0 0.0
        %961 = vmatpush.msra.mxu0 0.0
        %962 = vmatpush.msra.mxu0 0.0
        %963 = vmatpush.msra.mxu0 %v810
        %964 = vmatpush.msra.mxu0 %v806
        %965 = vmatpush.msra.mxu0 %v802
        %966 = vmatpush.msra.mxu0 %v798
        %967 = vmatmul.f32.gmra.mxu0 %v523
        %v968 = vpop.f32.mrf.mxu0
        %v969 = vadd.f32 %v889, %v968
        %970 = vdwg.mxu0
        %v971 = vadd.f32 %v909, %v608
        %v972 = vadd.f32 %v929, %v608
        %v973 = vadd.f32 %v949, %v608
        %v974 = vadd.f32 %v969, %v608
        %v979 = vrot.slane %v972, 4
        %v980 = vrot.slane %v974, 4
        %v981 = vsel %vm620, %v971, %v979
        %v982 = vsel %vm620, %v973, %v980
        %s985 = scalar_lea.vmem %s215, 16 [#allocation5]
        %986 = vst [vmem:[%s985] sm:$0x77] %v981
        %987 = vst [vmem:[%s985 + $0x8] sm:$0x77] %v982
        %s988 = sand.u32 %s118, 1
        %s989 = scalar_lea.sflag [#allocation4], %s988
        %s990 = sand.u32 %s118, 1
        %s991 = smul.addr %s990, 32
        %s992 = scalar_lea.vmem [#allocation5], %s991
        // Predicated region
        $region41: #{knowledge_model_forward_lane_dense.1} parent=35 // pred_check
          %p993 = pneg %p128
        $region42: #{knowledge_model_forward_lane_dense.1} parent=35 // pred_check_branch
          %995 = sbr.rel (%p993) target = $region44
        $region43: #{knowledge_model_forward_lane_dense.1} parent=35 // pred_region
          %s996 = smul.u32 8, %s21
          %998 = vsyncadd %s989, 0
          %s999 = smul.addr %s996, 4
          %s1000 = scalar_lea.hbm %s4, %s999
          %s1002 = sshll.u32 %s992, 4
          %s1003 = int_to_ptr.vmem [resolvable:$true] %s1002
          %s1004 = sshll.u32 %s1000, 4
          %s1005 = int_to_ptr.hbm [resolvable:$true] %s1004
          %1007 = dma.vmem_to_hbm [thread:$0]  %s1003, 512, %s1005, %s989
        $region44: #{knowledge_model_forward_lane_dense.1} parent=35 // pred_fallthru
          _
      $region36: #{knowledge_model_forward_lane_dense.1} parent=5 // pred_fallthru
        _
      %p1008 = scmp.le.s32.totalorder 2, %s16
      // Predicated region
      $region45: #{knowledge_model_forward_lane_dense.1} parent=5 // pred_check
        %p1009 = pneg %p1008
      $region46: #{knowledge_model_forward_lane_dense.1} parent=5 // pred_check_branch
        %1011 = sbr.rel (%p1009) target = $region48
      $region47: #{knowledge_model_forward_lane_dense.1} parent=5 // pred_region
        %s1012 = ssub.s32 %s16, 2
        // Predicated region
        $region49: #{knowledge_model_forward_lane_dense.1} parent=47 // pred_check
          %p1013 = pneg %p134
        $region50: #{knowledge_model_forward_lane_dense.1} parent=47 // pred_check_branch
          %1015 = sbr.rel (%p1013) target = $region52
        $region51: #{knowledge_model_forward_lane_dense.1} parent=47 // pred_region
          %s1016 = sand.u32 %s119, 1
          %s1017 = scalar_lea.sflag [#allocation4], %s1016
          %s1018 = sand.u32 %s119, 1
          %s1019 = smul.addr %s1018, 32
          %s1020 = scalar_lea.vmem [#allocation5], %s1019
          %1022 = dma.done %s1017, 512
        $region52: #{knowledge_model_forward_lane_dense.1} parent=47 // pred_fallthru
          _
      $region48: #{knowledge_model_forward_lane_dense.1} parent=5 // pred_fallthru
        _
    $region6: #{knowledge_model_forward_lane_dense.1} parent=1 // loop_footer
      %s20 = sadd.s32 1, %s16
    $region7: #{knowledge_model_forward_lane_dense.1} parent=1 // loop_footer_branch
      %15 = sbr.rel target = $region3
    $region8: #{knowledge_model_forward_lane_dense.1} parent=1 // loop_exit
      _
    %1023 = vsyncpa [#allocation3], 1
    %s1024 = scalar_lea.sflag [#allocation3], 1
    %1025 = vsyncpa %s1024, 1
    %1026 = vsyncpa [#allocation4], 1
    %s1027 = scalar_lea.sflag [#allocation4], 1
    %1028 = vsyncpa %s1027, 1

</llo_original>
